<compile_context>
chip_gen: v6e
topology: v6e:2x2x1
jax: 0.10.0
libtpu: 0.0.40
codegen_flags: <defaults>
</compile_context>

<pallas_src>
import functools

import jax
import jax.numpy as jnp
import numpy as np
from jax.experimental import pallas as pl
from jax.experimental.pallas import tpu as pltpu

HIDDEN = 256        # torch.nn.Linear(n_feat, 256) etc.
LANE = 128
SUBLANE = 8
MAX_ATOM_TILE = 1024  # atoms per grid step if the atom count is large


def _round_up(x, m):
    return (x + m - 1) // m * m


def _silu(x):
    return x * jax.nn.sigmoid(x)


def _energy_kernel(x_ref, w1_ref, b1_ref, w2_ref, b2_ref, w3_ref, b3_ref,
                   oht_ref, pooled_ref):
    """One grid step = (species s, atom-tile t).

    x_ref      : (1, TN, F_pad)     padded power-spectrum features (f32/bf16)
    w1/w2/w3   : per-species hidden weights, bf16 (MXU operands)
    b1/b2/b3   : (1, 1, H)          f32 biases (elementwise math stays f32)
    oht_ref    : (1, NS_sub, TN)    transposed one-hot structure membership, bf16
    pooled_ref : (1, 1, NS_sub, H)  per-structure pooled activations of this
                                    grid step (lane-dense H=256 store).
    """
    x = x_ref[0].astype(jnp.bfloat16)                              # [TN, F_pad]

    # bf16 x bf16 MXU matmuls, f32 accumulation; bias + SiLU in f32.
    h = jnp.dot(x, w1_ref[0], preferred_element_type=jnp.float32) + b1_ref[0]
    h = _silu(h)
    h = jnp.dot(h.astype(jnp.bfloat16), w2_ref[0],
                preferred_element_type=jnp.float32) + b2_ref[0]
    h = _silu(h)
    h = jnp.dot(h.astype(jnp.bfloat16), w3_ref[0],
                preferred_element_type=jnp.float32) + b3_ref[0]
    h = _silu(h)                                                   # [TN, H] f32

    # index_add_ reordered as "pool atoms first".  Padded atom rows have a
    # nonzero h (SiLU chain of the biases) but their one-hot columns are zero,
    # so they contribute nothing here — keep that invariant if this changes.
    oht = oht_ref[0]                                               # [NS_sub, TN]
    pooled_ref[0, 0] = jnp.dot(oht, h.astype(jnp.bfloat16),
                               preferred_element_type=jnp.float32)


@functools.partial(jax.jit, static_argnames=("features_bf16",))
def ps_energy_model(features, onehot, w1, b1, w2, b2, w3, b3, w4, b4,
                    features_bf16=False):
    """features: [S, N, F] f32; onehot: [S, N, n_struct] f32 (structure index).

    Weights per species: w1 [S,F,H], b1 [S,1,H], w2/w3 [S,H,H], b2/b3 [S,1,H],
    w4 [S,H,1], b4 [S,1,1].  Returns energies [n_struct].
    """
    S, N, F = features.shape
    n_struct = onehot.shape[-1]
    H = HIDDEN

    # Padded / aligned layout (layout plumbing only).
    F_pad = _round_up(F, LANE)
    NS_sub = _round_up(max(n_struct, SUBLANE), SUBLANE)

    N8 = _round_up(N, SUBLANE)
    if N8 <= MAX_ATOM_TILE:
        tile_n, n_tiles = N8, 1
    else:
        # Split evenly (128-aligned so the oht lane dim stays legal) to avoid
        # large padding waste when N is just above the tile cap.
        n_tiles = pl.cdiv(N, MAX_ATOM_TILE)
        tile_n = _round_up(pl.cdiv(N, n_tiles), LANE)
    # v7x megacore: a single-species problem should still expose >=2 parallel
    # grid units so both TensorCores get work.
    if S == 1 and n_tiles == 1 and N8 >= 2 * LANE:
        n_tiles = 2
        tile_n = _round_up(pl.cdiv(N, 2), LANE)
    n_pad = tile_n * n_tiles

    x_dtype = jnp.bfloat16 if features_bf16 else jnp.float32
    x = jnp.pad(features,
                ((0, 0), (0, n_pad - N), (0, F_pad - F))).astype(x_dtype)
    # Transposed one-hot: [S, NS_sub, n_pad]; padded atoms/structures are zero
    # rows/cols, so they contribute nothing.  bf16 is exact for 0/1 values.
    oht = jnp.pad(jnp.swapaxes(onehot, 1, 2),
                  ((0, 0), (0, NS_sub - n_struct),
                   (0, n_pad - N))).astype(jnp.bfloat16)

    # bf16 weights for the three big matmuls (native MXU rate, half the DMA);
    # pad w1 rows to match the padded feature dim.  Biases stay f32.
    w1p = jnp.pad(w1, ((0, 0), (0, F_pad - F), (0, 0))).astype(jnp.bfloat16)
    w2b = w2.astype(jnp.bfloat16)
    w3b = w3.astype(jnp.bfloat16)

    # VMEM budget: double-buffered inputs + output, with margin.  Capped at
    # 64 MiB so it stays valid on v7x (64 MiB/TC).
    bytes_per_step = (tile_n * F_pad * x.dtype.itemsize      # features tile
                      + F_pad * H * 2 + 2 * H * H * 2        # bf16 weights
                      + 3 * H * 4                            # biases
                      + NS_sub * tile_n * 2                  # one-hot^T
                      + NS_sub * H * 4)                      # pooled output
    vmem_limit = int(min(64 * 2 ** 20, max(32 * 2 ** 20, 3 * bytes_per_step)))

    pooled = pl.pallas_call(
        _energy_kernel,
        out_shape=jax.ShapeDtypeStruct((S, n_tiles, NS_sub, H), jnp.float32),
        grid_spec=pltpu.PrefetchScalarGridSpec(
            num_scalar_prefetch=0,
            grid=(S, n_tiles),
            in_specs=[
                pl.BlockSpec((1, tile_n, F_pad), lambda s, t: (s, t, 0)),   # x
                pl.BlockSpec((1, F_pad, H), lambda s, t: (s, 0, 0)),        # w1
                pl.BlockSpec((1, 1, H), lambda s, t: (s, 0, 0)),            # b1
                pl.BlockSpec((1, H, H), lambda s, t: (s, 0, 0)),            # w2
                pl.BlockSpec((1, 1, H), lambda s, t: (s, 0, 0)),            # b2
                pl.BlockSpec((1, H, H), lambda s, t: (s, 0, 0)),            # w3
                pl.BlockSpec((1, 1, H), lambda s, t: (s, 0, 0)),            # b3
                pl.BlockSpec((1, NS_sub, tile_n), lambda s, t: (s, 0, t)),  # oht
            ],
            # Every (species, atom-tile) writes its own partial block -> no
            # cross-step dependency -> both grid axes can be parallel.
            out_specs=pl.BlockSpec((1, 1, NS_sub, H),
                                   lambda s, t: (s, t, 0, 0)),
        ),
        compiler_params=pltpu.CompilerParams(
            dimension_semantics=("parallel", "parallel"),
            vmem_limit_bytes=vmem_limit),
    )(x, w1p, b1, w2b, b2, w3b, b3, oht)

    # Tiny epilogue in XLA: last Linear(256,1) on the pooled activations plus
    # the bias, counted once per atom (counts * b4), then drop padding.
    pooled = jnp.sum(pooled, axis=1)[:, :n_struct, :]       # [S, n_struct, H]
    e = jnp.einsum('sjh,sh->j', pooled, w4[:, :, 0])        # [n_struct]
    counts = jnp.sum(onehot, axis=1)                        # [S, n_struct]
    e = e + jnp.sum(counts * b4[:, :, 0], axis=0)
    return e


def ps_energy_reference(features, onehot, w1, b1, w2, b2, w3, b3, w4, b4):
    """Pure-JAX reference mirroring Model._apply_layer semantics, with the same
    bf16 MXU-operand rounding as the kernel (f32 accumulation / elementwise).
    The pure-f32 PyTorch result differs from this by ~bf16 eps per layer."""
    S = features.shape[0]
    n_struct = onehot.shape[-1]
    bf = lambda a: a.astype(jnp.bfloat16)
    e = jnp.zeros((n_struct,), jnp.float32)
    for s in range(S):
        h = _silu(jnp.dot(bf(features[s]), bf(w1[s]),
                          preferred_element_type=jnp.float32) + b1[s, 0])
        h = _silu(jnp.dot(bf(h), bf(w2[s]),
                          preferred_element_type=jnp.float32) + b2[s, 0])
        h = _silu(jnp.dot(bf(h), bf(w3[s]),
                          preferred_element_type=jnp.float32) + b3[s, 0])
        a = jnp.dot(bf(h).astype(jnp.float32), w4[s],
                    preferred_element_type=jnp.float32) + b4[s, 0]   # [N, 1]
        e = e + jnp.sum(a * onehot[s], axis=0)                       # index_add_
    return e


if __name__ == "__main__":
    key = jax.random.PRNGKey(0)

    # Small, module-consistent shapes:
    #   all_species = [1, 6]  (H, C)            -> S = 2 species
    #   radial basis n_max_l = [4, 3, 2]        -> l_max = 2
    #   n_feat = sum_l n_max[l]^2 * len(species)^2 = (16+9+4)*4 = 116
    all_species = np.array([1, 6])
    n_max = [4, 3, 2]
    S = len(all_species)
    F = sum(n ** 2 * S ** 2 for n in n_max)            # 116
    N = 8                                              # atoms per species
    n_struct = 2                                       # structures in the batch
    H = HIDDEN

    ks = jax.random.split(key, 12)
    features = jax.random.normal(ks[0], (S, N, F), jnp.float32)

    def uinit(k, shape, fan_in):
        bound = 1.0 / np.sqrt(fan_in)
        return jax.random.uniform(k, shape, jnp.float32, -bound, bound)

    w1 = uinit(ks[1], (S, F, H), F)
    b1 = uinit(ks[2], (S, 1, H), F)
    w2 = uinit(ks[3], (S, H, H), H)
    b2 = uinit(ks[4], (S, 1, H), H)
    w3 = uinit(ks[5], (S, H, H), H)
    b3 = uinit(ks[6], (S, 1, H), H)
    w4 = uinit(ks[7], (S, H, 1), H)
    b4 = uinit(ks[8], (S, 1, 1), H)

    # structure index of each atom (block.samples['structure']) -> one-hot.
    struct_idx = jax.random.randint(ks[9], (S, N), 0, n_struct)
    onehot = jax.nn.one_hot(struct_idx, n_struct, dtype=jnp.float32)

    params = (w1, b1, w2, b2, w3, b3, w4, b4)

    energies = ps_energy_model(features, onehot, *params)
    energies = jax.block_until_ready(energies)

    ref = ps_energy_reference(features, onehot, *params)
    np.testing.assert_allclose(np.asarray(energies), np.asarray(ref),
                               rtol=2e-3, atol=2e-3)

    print("KERNEL_OK")
</pallas_src>

<mosaic_0001>
module attributes {stable_mosaic.version = 11 : i64} {
  func.func @_energy_kernel(%arg0: i32, %arg1: i32, %arg2: memref<1x8x128xf32, #tpu.memory_space<vmem>>, %arg3: memref<1x128x256xbf16, #tpu.memory_space<vmem>>, %arg4: memref<1x1x256xf32, #tpu.memory_space<vmem>>, %arg5: memref<1x256x256xbf16, #tpu.memory_space<vmem>>, %arg6: memref<1x1x256xf32, #tpu.memory_space<vmem>>, %arg7: memref<1x256x256xbf16, #tpu.memory_space<vmem>>, %arg8: memref<1x1x256xf32, #tpu.memory_space<vmem>>, %arg9: memref<1x8x8xbf16, #tpu.memory_space<vmem>>, %arg10: memref<1x1x8x256xf32, #tpu.memory_space<vmem>>) attributes {dimension_semantics = [#tpu.dimension_semantics<parallel>, #tpu.dimension_semantics<parallel>], iteration_bounds = array<i64: 2, 1>, scalar_prefetch = 0 : i64, scratch_operands = 0 : i64, tpu.core_type = #tpu.core_type<tc>, window_params = [{transform_indices = @transform_0, window_bounds = array<i64: 1, 8, 128>}, {transform_indices = @transform_1, window_bounds = array<i64: 1, 128, 256>}, {transform_indices = @transform_2, window_bounds = array<i64: 1, 1, 256>}, {transform_indices = @transform_3, window_bounds = array<i64: 1, 256, 256>}, {transform_indices = @transform_4, window_bounds = array<i64: 1, 1, 256>}, {transform_indices = @transform_5, window_bounds = array<i64: 1, 256, 256>}, {transform_indices = @transform_6, window_bounds = array<i64: 1, 1, 256>}, {transform_indices = @transform_7, window_bounds = array<i64: 1, 8, 8>}, {transform_indices = @transform_8, window_bounds = array<i64: 1, 1, 8, 256>}]} {
    %c0 = arith.constant 0 : index
    %c0_0 = arith.constant 0 : index
    %c0_1 = arith.constant 0 : index
    %0 = vector.load %arg2[%c0, %c0_0, %c0_1] : memref<1x8x128xf32, #tpu.memory_space<vmem>>, vector<1x8x128xf32>
    %1 = vector.shape_cast %0 : vector<1x8x128xf32> to vector<8x128xf32>
    %2 = arith.truncf %1 : vector<8x128xf32> to vector<8x128xbf16>
    %c0_2 = arith.constant 0 : index
    %c0_3 = arith.constant 0 : index
    %c0_4 = arith.constant 0 : index
    %3 = vector.load %arg3[%c0_2, %c0_3, %c0_4] : memref<1x128x256xbf16, #tpu.memory_space<vmem>>, vector<1x128x256xbf16>
    %4 = vector.shape_cast %3 : vector<1x128x256xbf16> to vector<128x256xbf16>
    %cst = arith.constant dense<0.000000e+00> : vector<8x256xf32>
    %5 = tpu.matmul %2, %4, %cst {dimension_numbers = #tpu.dot_dimension_numbers<[1], [0], [0], [1], [0, 0, 1, 1], [], []>} : vector<8x128xbf16>, vector<128x256xbf16>, vector<8x256xf32> -> vector<8x256xf32>
    %c0_5 = arith.constant 0 : index
    %c0_6 = arith.constant 0 : index
    %c0_7 = arith.constant 0 : index
    %6 = vector.load %arg4[%c0_5, %c0_6, %c0_7] : memref<1x1x256xf32, #tpu.memory_space<vmem>>, vector<1x1x256xf32>
    %7 = vector.shape_cast %6 : vector<1x1x256xf32> to vector<1x256xf32>
    %8 = vector.broadcast %7 : vector<1x256xf32> to vector<8x256xf32>
    %9 = arith.addf %5, %8 : vector<8x256xf32>
    %10 = arith.negf %9 : vector<8x256xf32>
    %11 = math.exp %10 : vector<8x256xf32>
    %cst_8 = arith.constant 1.000000e+00 : f32
    %12 = vector.broadcast %cst_8 : f32 to vector<8x256xf32>
    %13 = arith.addf %12, %11 : vector<8x256xf32>
    %14 = arith.divf %12, %13 : vector<8x256xf32>
    %15 = arith.mulf %9, %14 : vector<8x256xf32>
    %16 = arith.truncf %15 : vector<8x256xf32> to vector<8x256xbf16>
    %c0_9 = arith.constant 0 : index
    %c0_10 = arith.constant 0 : index
    %c0_11 = arith.constant 0 : index
    %17 = vector.load %arg5[%c0_9, %c0_10, %c0_11] : memref<1x256x256xbf16, #tpu.memory_space<vmem>>, vector<1x256x256xbf16>
    %18 = vector.shape_cast %17 : vector<1x256x256xbf16> to vector<256x256xbf16>
    %cst_12 = arith.constant dense<0.000000e+00> : vector<8x256xf32>
    %19 = tpu.matmul %16, %18, %cst_12 {dimension_numbers = #tpu.dot_dimension_numbers<[1], [0], [0], [1], [0, 0, 1, 1], [], []>} : vector<8x256xbf16>, vector<256x256xbf16>, vector<8x256xf32> -> vector<8x256xf32>
    %c0_13 = arith.constant 0 : index
    %c0_14 = arith.constant 0 : index
    %c0_15 = arith.constant 0 : index
    %20 = vector.load %arg6[%c0_13, %c0_14, %c0_15] : memref<1x1x256xf32, #tpu.memory_space<vmem>>, vector<1x1x256xf32>
    %21 = vector.shape_cast %20 : vector<1x1x256xf32> to vector<1x256xf32>
    %22 = vector.broadcast %21 : vector<1x256xf32> to vector<8x256xf32>
    %23 = arith.addf %19, %22 : vector<8x256xf32>
    %24 = arith.negf %23 : vector<8x256xf32>
    %25 = math.exp %24 : vector<8x256xf32>
    %cst_16 = arith.constant 1.000000e+00 : f32
    %26 = vector.broadcast %cst_16 : f32 to vector<8x256xf32>
    %27 = arith.addf %26, %25 : vector<8x256xf32>
    %28 = arith.divf %26, %27 : vector<8x256xf32>
    %29 = arith.mulf %23, %28 : vector<8x256xf32>
    %30 = arith.truncf %29 : vector<8x256xf32> to vector<8x256xbf16>
    %c0_17 = arith.constant 0 : index
    %c0_18 = arith.constant 0 : index
    %c0_19 = arith.constant 0 : index
    %31 = vector.load %arg7[%c0_17, %c0_18, %c0_19] : memref<1x256x256xbf16, #tpu.memory_space<vmem>>, vector<1x256x256xbf16>
    %32 = vector.shape_cast %31 : vector<1x256x256xbf16> to vector<256x256xbf16>
    %cst_20 = arith.constant dense<0.000000e+00> : vector<8x256xf32>
    %33 = tpu.matmul %30, %32, %cst_20 {dimension_numbers = #tpu.dot_dimension_numbers<[1], [0], [0], [1], [0, 0, 1, 1], [], []>} : vector<8x256xbf16>, vector<256x256xbf16>, vector<8x256xf32> -> vector<8x256xf32>
    %c0_21 = arith.constant 0 : index
    %c0_22 = arith.constant 0 : index
    %c0_23 = arith.constant 0 : index
    %34 = vector.load %arg8[%c0_21, %c0_22, %c0_23] : memref<1x1x256xf32, #tpu.memory_space<vmem>>, vector<1x1x256xf32>
    %35 = vector.shape_cast %34 : vector<1x1x256xf32> to vector<1x256xf32>
    %36 = vector.broadcast %35 : vector<1x256xf32> to vector<8x256xf32>
    %37 = arith.addf %33, %36 : vector<8x256xf32>
    %38 = arith.negf %37 : vector<8x256xf32>
    %39 = math.exp %38 : vector<8x256xf32>
    %cst_24 = arith.constant 1.000000e+00 : f32
    %40 = vector.broadcast %cst_24 : f32 to vector<8x256xf32>
    %41 = arith.addf %40, %39 : vector<8x256xf32>
    %42 = arith.divf %40, %41 : vector<8x256xf32>
    %43 = arith.mulf %37, %42 : vector<8x256xf32>
    %c0_25 = arith.constant 0 : index
    %c0_26 = arith.constant 0 : index
    %c0_27 = arith.constant 0 : index
    %44 = vector.load %arg9[%c0_25, %c0_26, %c0_27] : memref<1x8x8xbf16, #tpu.memory_space<vmem>>, vector<1x8x8xbf16>
    %45 = vector.shape_cast %44 : vector<1x8x8xbf16> to vector<8x8xbf16>
    %46 = arith.truncf %43 : vector<8x256xf32> to vector<8x256xbf16>
    %cst_28 = arith.constant dense<0.000000e+00> : vector<8x256xf32>
    %47 = tpu.matmul %45, %46, %cst_28 {dimension_numbers = #tpu.dot_dimension_numbers<[1], [0], [0], [1], [0, 0, 1, 1], [], []>} : vector<8x8xbf16>, vector<8x256xbf16>, vector<8x256xf32> -> vector<8x256xf32>
    %c0_29 = arith.constant 0 : index
    %c0_30 = arith.constant 0 : index
    %c0_31 = arith.constant 0 : index
    %c0_32 = arith.constant 0 : index
    %48 = vector.load %arg10[%c0_29, %c0_30, %c0_31, %c0_32] : memref<1x1x8x256xf32, #tpu.memory_space<vmem>>, vector<1x1x8x256xf32>
    %49 = vector.shape_cast %48 : vector<1x1x8x256xf32> to vector<8x256xf32>
    %50 = vector.shape_cast %47 : vector<8x256xf32> to vector<1x1x8x256xf32>
    tpu.vector_store %arg10[%c0_29, %c0_30, %c0_31, %c0_32], %50 {strides = array<i32>} : memref<1x1x8x256xf32, #tpu.memory_space<vmem>>, vector<1x1x8x256xf32>,
    return
  }
  func.func @transform_0(%arg0: i32, %arg1: i32) -> (i32, i32, i32) {
    %c0_i32 = arith.constant 0 : i32
    %c0_i32_0 = arith.constant 0 : i32
    return %arg0, %arg1, %c0_i32 : i32, i32, i32
  }
  func.func @transform_1(%arg0: i32, %arg1: i32) -> (i32, i32, i32) {
    %c0_i32 = arith.constant 0 : i32
    %c0_i32_0 = arith.constant 0 : i32
    %c0_i32_1 = arith.constant 0 : i32
    return %arg0, %c0_i32, %c0_i32_0 : i32, i32, i32
  }
  func.func @transform_2(%arg0: i32, %arg1: i32) -> (i32, i32, i32) {
    %c0_i32 = arith.constant 0 : i32
    %c0_i32_0 = arith.constant 0 : i32
    %c0_i32_1 = arith.constant 0 : i32
    return %arg0, %c0_i32, %c0_i32_0 : i32, i32, i32
  }
  func.func @transform_3(%arg0: i32, %arg1: i32) -> (i32, i32, i32) {
    %c0_i32 = arith.constant 0 : i32
    %c0_i32_0 = arith.constant 0 : i32
    %c0_i32_1 = arith.constant 0 : i32
    return %arg0, %c0_i32, %c0_i32_0 : i32, i32, i32
  }
  func.func @transform_4(%arg0: i32, %arg1: i32) -> (i32, i32, i32) {
    %c0_i32 = arith.constant 0 : i32
    %c0_i32_0 = arith.constant 0 : i32
    %c0_i32_1 = arith.constant 0 : i32
    return %arg0, %c0_i32, %c0_i32_0 : i32, i32, i32
  }
  func.func @transform_5(%arg0: i32, %arg1: i32) -> (i32, i32, i32) {
    %c0_i32 = arith.constant 0 : i32
    %c0_i32_0 = arith.constant 0 : i32
    %c0_i32_1 = arith.constant 0 : i32
    return %arg0, %c0_i32, %c0_i32_0 : i32, i32, i32
  }
  func.func @transform_6(%arg0: i32, %arg1: i32) -> (i32, i32, i32) {
    %c0_i32 = arith.constant 0 : i32
    %c0_i32_0 = arith.constant 0 : i32
    %c0_i32_1 = arith.constant 0 : i32
    return %arg0, %c0_i32, %c0_i32_0 : i32, i32, i32
  }
  func.func @transform_7(%arg0: i32, %arg1: i32) -> (i32, i32, i32) {
    %c0_i32 = arith.constant 0 : i32
    %c0_i32_0 = arith.constant 0 : i32
    return %arg0, %c0_i32, %arg1 : i32, i32, i32
  }
  func.func @transform_8(%arg0: i32, %arg1: i32) -> (i32, i32, i32, i32) {
    %c0_i32 = arith.constant 0 : i32
    %c0_i32_0 = arith.constant 0 : i32
    %c0_i32_1 = arith.constant 0 : i32
    return %arg0, %arg1, %c0_i32, %c0_i32_0 : i32, i32, i32, i32
  }
}

</mosaic_0001>

<llo_original>
// kernel: ps_energy_model.1
$region0: #{ps_energy_model.1}
  #allocation0 [shape = 'u32[]', space=smem, size = 0x4, offset = 0x4, fixed_abs, tag = 'smem constant byte address 0x4 - core index']
  #allocation1 [shape = 'u32[144,128]{1,0:T(1,128)}', space=vmem, size = 0x12000, scoped, tag = 'internal scratch']
  %s0 = inlined_call_operand.vmem [shape: f32[2,8,128], index: 0, kind: input, shape index: {}]
  %s1 = inlined_call_operand.vmem [shape: bf16[2,128,256], index: 1, kind: input, shape index: {}]
  %s2 = inlined_call_operand.vmem [shape: f32[2,1,256], index: 2, kind: input, shape index: {}]
  %s3 = inlined_call_operand.vmem [shape: bf16[2,256,256], index: 3, kind: input, shape index: {}]
  %s4 = inlined_call_operand.vmem [shape: f32[2,1,256], index: 4, kind: input, shape index: {}]
  %s5 = inlined_call_operand.vmem [shape: bf16[2,256,256], index: 5, kind: input, shape index: {}]
  %s6 = inlined_call_operand.vmem [shape: f32[2,1,256], index: 6, kind: input, shape index: {}]
  %s7 = inlined_call_operand.vmem [shape: bf16[2,8,8], index: 7, kind: input, shape index: {}]
  %s8 = inlined_call_operand.vmem [shape: f32[2,1,8,256], index: 8, kind: output, shape index: {}]
  %s9 = sld [smem:[#allocation0]]
  $region65: #{ps_energy_model.1} parent=0
    _
  %s11 = ssub.s32 1, %s9
  %s12 = scalar_select 0, %s11, %s9
  loop: start=0, step=1, limit=4
  $region2: #{ps_energy_model.1} parent=0 // loop_pre_header
    _
  $region3: #{ps_energy_model.1} parent=0 // loop_header
    %s14 = sphi 0, %s18
    %p15 = scmp.ge.s32.totalorder %s14, 4
    %s21 = sphi 0, %s33
    %s22 = sphi 0, %s29
    %s23 = sphi 0, %s21
    %s24 = sphi 0, %s22
    %s25 = sphi 0, %s23
    %s26 = sphi 0, %s24
    %s38 = sphi 0, %s40
    %s41 = sphi 0, %s38
    %s42 = sphi 0, %s41
    %s58 = sphi 0, %s42
    %s64 = sphi 0, %s66
    %s67 = sphi 0, %s64
    %s68 = sphi 0, %s67
    %s84 = sphi 0, %s68
    %s90 = sphi 0, %s92
    %s93 = sphi 0, %s90
    %s94 = sphi 0, %s93
    %s110 = sphi 0, %s94
    %s116 = sphi 0, %s118
    %s119 = sphi 0, %s116
    %s120 = sphi 0, %s119
    %s136 = sphi 0, %s120
    %s142 = sphi 0, %s144
    %s145 = sphi 0, %s142
    %s146 = sphi 0, %s145
    %s162 = sphi 0, %s146
    %s168 = sphi 0, %s170
    %s171 = sphi 0, %s168
    %s172 = sphi 0, %s171
    %s188 = sphi 0, %s172
    %s194 = sphi 0, %s196
    %s197 = sphi 0, %s194
    %s198 = sphi 0, %s197
    %s214 = sphi 0, %s198
    %s222 = sphi 0, %s224
    %s225 = sphi 0, %s222
    %s226 = sphi 0, %s225
    %s242 = sphi 0, %s226
    %s250 = sphi 0, %s252
    %s253 = sphi 0, %s250
    %s254 = sphi 0, %s253
    %s270 = sphi 0, %s254
  $region4: #{ps_energy_model.1} parent=0 // loop_header_branch
    %17 = sbr.rel (%p15) target = $region8
  $region5: #{ps_energy_model.1} parent=0 // loop_body
    %s19 = ssub.s32 %s14, 1
    %s20 = ssub.s32 %s14, 2
    %s27 = sadd.s32 1, %s22
    %p28 = scmp.ge.s32.totalorder %s27, 1
    %s29 = scalar_select %p28, 0, %s27
    %s30 = sadd.s32 1, %s21
    %s31 = scalar_select %p28, %s30, %s21
    %p32 = scmp.ge.s32.totalorder %s31, 2
    %s33 = scalar_select %p32, 0, %s31
    %s34 = ssub.s32 %s21, %s33
    %s35 = ssub.s32 %s22, %s29
    %s36 = sor.u32 %s34, %s35
    %p37 = scmp.eq.s32.totalorder %s36, 0
    %s39 = sadd.s32 %s38, 1
    %s40 = scalar_select %p37, %s38, %s39
    %p43 = pneg %p37
    %p44 = scmp.eq.s32.totalorder %s14, 1
    %p45 = por %p43, %p44
    %p46 = scmp.ne.s32.totalorder %s38, %s41
    %p47 = scmp.eq.s32.totalorder %s14, 0
    %p48 = por %p46, %p47
    %p49 = scmp.ne.s32.totalorder %s38, %s41
    %p50 = scmp.eq.s32.totalorder %s19, 1
    %p51 = por %p49, %p50
    %p52 = scmp.ne.s32.totalorder %s41, %s42
    %p53 = scmp.eq.s32.totalorder %s19, 0
    %p54 = por %p52, %p53
    %p55 = scmp.ne.s32.totalorder %s41, %s42
    %p56 = scmp.eq.s32.totalorder %s20, 1
    %p57 = por %p55, %p56
    %p59 = scmp.ne.s32.totalorder %s42, %s58
    %p60 = scmp.eq.s32.totalorder %s20, 0
    %p61 = por %p59, %p60
    %s62 = ssub.s32 %s21, %s33
    %p63 = scmp.eq.s32.totalorder %s62, 0
    %s65 = sadd.s32 %s64, 1
    %s66 = scalar_select %p63, %s64, %s65
    %p69 = pneg %p63
    %p70 = scmp.eq.s32.totalorder %s14, 1
    %p71 = por %p69, %p70
    %p72 = scmp.ne.s32.totalorder %s64, %s67
    %p73 = scmp.eq.s32.totalorder %s14, 0
    %p74 = por %p72, %p73
    %p75 = scmp.ne.s32.totalorder %s64, %s67
    %p76 = scmp.eq.s32.totalorder %s19, 1
    %p77 = por %p75, %p76
    %p78 = scmp.ne.s32.totalorder %s67, %s68
    %p79 = scmp.eq.s32.totalorder %s19, 0
    %p80 = por %p78, %p79
    %p81 = scmp.ne.s32.totalorder %s67, %s68
    %p82 = scmp.eq.s32.totalorder %s20, 1
    %p83 = por %p81, %p82
    %p85 = scmp.ne.s32.totalorder %s68, %s84
    %p86 = scmp.eq.s32.totalorder %s20, 0
    %p87 = por %p85, %p86
    %s88 = ssub.s32 %s21, %s33
    %p89 = scmp.eq.s32.totalorder %s88, 0
    %s91 = sadd.s32 %s90, 1
    %s92 = scalar_select %p89, %s90, %s91
    %p95 = pneg %p89
    %p96 = scmp.eq.s32.totalorder %s14, 1
    %p97 = por %p95, %p96
    %p98 = scmp.ne.s32.totalorder %s90, %s93
    %p99 = scmp.eq.s32.totalorder %s14, 0
    %p100 = por %p98, %p99
    %p101 = scmp.ne.s32.totalorder %s90, %s93
    %p102 = scmp.eq.s32.totalorder %s19, 1
    %p103 = por %p101, %p102
    %p104 = scmp.ne.s32.totalorder %s93, %s94
    %p105 = scmp.eq.s32.totalorder %s19, 0
    %p106 = por %p104, %p105
    %p107 = scmp.ne.s32.totalorder %s93, %s94
    %p108 = scmp.eq.s32.totalorder %s20, 1
    %p109 = por %p107, %p108
    %p111 = scmp.ne.s32.totalorder %s94, %s110
    %p112 = scmp.eq.s32.totalorder %s20, 0
    %p113 = por %p111, %p112
    %s114 = ssub.s32 %s21, %s33
    %p115 = scmp.eq.s32.totalorder %s114, 0
    %s117 = sadd.s32 %s116, 1
    %s118 = scalar_select %p115, %s116, %s117
    %p121 = pneg %p115
    %p122 = scmp.eq.s32.totalorder %s14, 1
    %p123 = por %p121, %p122
    %p124 = scmp.ne.s32.totalorder %s116, %s119
    %p125 = scmp.eq.s32.totalorder %s14, 0
    %p126 = por %p124, %p125
    %p127 = scmp.ne.s32.totalorder %s116, %s119
    %p128 = scmp.eq.s32.totalorder %s19, 1
    %p129 = por %p127, %p128
    %p130 = scmp.ne.s32.totalorder %s119, %s120
    %p131 = scmp.eq.s32.totalorder %s19, 0
    %p132 = por %p130, %p131
    %p133 = scmp.ne.s32.totalorder %s119, %s120
    %p134 = scmp.eq.s32.totalorder %s20, 1
    %p135 = por %p133, %p134
    %p137 = scmp.ne.s32.totalorder %s120, %s136
    %p138 = scmp.eq.s32.totalorder %s20, 0
    %p139 = por %p137, %p138
    %s140 = ssub.s32 %s21, %s33
    %p141 = scmp.eq.s32.totalorder %s140, 0
    %s143 = sadd.s32 %s142, 1
    %s144 = scalar_select %p141, %s142, %s143
    %p147 = pneg %p141
    %p148 = scmp.eq.s32.totalorder %s14, 1
    %p149 = por %p147, %p148
    %p150 = scmp.ne.s32.totalorder %s142, %s145
    %p151 = scmp.eq.s32.totalorder %s14, 0
    %p152 = por %p150, %p151
    %p153 = scmp.ne.s32.totalorder %s142, %s145
    %p154 = scmp.eq.s32.totalorder %s19, 1
    %p155 = por %p153, %p154
    %p156 = scmp.ne.s32.totalorder %s145, %s146
    %p157 = scmp.eq.s32.totalorder %s19, 0
    %p158 = por %p156, %p157
    %p159 = scmp.ne.s32.totalorder %s145, %s146
    %p160 = scmp.eq.s32.totalorder %s20, 1
    %p161 = por %p159, %p160
    %p163 = scmp.ne.s32.totalorder %s146, %s162
    %p164 = scmp.eq.s32.totalorder %s20, 0
    %p165 = por %p163, %p164
    %s166 = ssub.s32 %s21, %s33
    %p167 = scmp.eq.s32.totalorder %s166, 0
    %s169 = sadd.s32 %s168, 1
    %s170 = scalar_select %p167, %s168, %s169
    %p173 = pneg %p167
    %p174 = scmp.eq.s32.totalorder %s14, 1
    %p175 = por %p173, %p174
    %p176 = scmp.ne.s32.totalorder %s168, %s171
    %p177 = scmp.eq.s32.totalorder %s14, 0
    %p178 = por %p176, %p177
    %p179 = scmp.ne.s32.totalorder %s168, %s171
    %p180 = scmp.eq.s32.totalorder %s19, 1
    %p181 = por %p179, %p180
    %p182 = scmp.ne.s32.totalorder %s171, %s172
    %p183 = scmp.eq.s32.totalorder %s19, 0
    %p184 = por %p182, %p183
    %p185 = scmp.ne.s32.totalorder %s171, %s172
    %p186 = scmp.eq.s32.totalorder %s20, 1
    %p187 = por %p185, %p186
    %p189 = scmp.ne.s32.totalorder %s172, %s188
    %p190 = scmp.eq.s32.totalorder %s20, 0
    %p191 = por %p189, %p190
    %s192 = ssub.s32 %s21, %s33
    %p193 = scmp.eq.s32.totalorder %s192, 0
    %s195 = sadd.s32 %s194, 1
    %s196 = scalar_select %p193, %s194, %s195
    %p199 = pneg %p193
    %p200 = scmp.eq.s32.totalorder %s14, 1
    %p201 = por %p199, %p200
    %p202 = scmp.ne.s32.totalorder %s194, %s197
    %p203 = scmp.eq.s32.totalorder %s14, 0
    %p204 = por %p202, %p203
    %p205 = scmp.ne.s32.totalorder %s194, %s197
    %p206 = scmp.eq.s32.totalorder %s19, 1
    %p207 = por %p205, %p206
    %p208 = scmp.ne.s32.totalorder %s197, %s198
    %p209 = scmp.eq.s32.totalorder %s19, 0
    %p210 = por %p208, %p209
    %p211 = scmp.ne.s32.totalorder %s197, %s198
    %p212 = scmp.eq.s32.totalorder %s20, 1
    %p213 = por %p211, %p212
    %p215 = scmp.ne.s32.totalorder %s198, %s214
    %p216 = scmp.eq.s32.totalorder %s20, 0
    %p217 = por %p215, %p216
    %s218 = ssub.s32 %s21, %s33
    %s219 = ssub.s32 %s22, %s29
    %s220 = sor.u32 %s218, %s219
    %p221 = scmp.eq.s32.totalorder %s220, 0
    %s223 = sadd.s32 %s222, 1
    %s224 = scalar_select %p221, %s222, %s223
    %p227 = pneg %p221
    %p228 = scmp.eq.s32.totalorder %s14, 1
    %p229 = por %p227, %p228
    %p230 = scmp.ne.s32.totalorder %s222, %s225
    %p231 = scmp.eq.s32.totalorder %s14, 0
    %p232 = por %p230, %p231
    %p233 = scmp.ne.s32.totalorder %s222, %s225
    %p234 = scmp.eq.s32.totalorder %s19, 1
    %p235 = por %p233, %p234
    %p236 = scmp.ne.s32.totalorder %s225, %s226
    %p237 = scmp.eq.s32.totalorder %s19, 0
    %p238 = por %p236, %p237
    %p239 = scmp.ne.s32.totalorder %s225, %s226
    %p240 = scmp.eq.s32.totalorder %s20, 1
    %p241 = por %p239, %p240
    %p243 = scmp.ne.s32.totalorder %s226, %s242
    %p244 = scmp.eq.s32.totalorder %s20, 0
    %p245 = por %p243, %p244
    %s246 = ssub.s32 %s21, %s33
    %s247 = ssub.s32 %s22, %s29
    %s248 = sor.u32 %s246, %s247
    %p249 = scmp.eq.s32.totalorder %s248, 0
    %s251 = sadd.s32 %s250, 1
    %s252 = scalar_select %p249, %s250, %s251
    %p255 = pneg %p249
    %p256 = scmp.eq.s32.totalorder %s14, 1
    %p257 = por %p255, %p256
    %p258 = scmp.ne.s32.totalorder %s250, %s253
    %p259 = scmp.eq.s32.totalorder %s14, 0
    %p260 = por %p258, %p259
    %p261 = scmp.ne.s32.totalorder %s250, %s253
    %p262 = scmp.eq.s32.totalorder %s19, 1
    %p263 = por %p261, %p262
    %p264 = scmp.ne.s32.totalorder %s253, %s254
    %p265 = scmp.eq.s32.totalorder %s19, 0
    %p266 = por %p264, %p265
    %p267 = scmp.ne.s32.totalorder %s253, %s254
    %p268 = scmp.eq.s32.totalorder %s20, 1
    %p269 = por %p267, %p268
    %p271 = scmp.ne.s32.totalorder %s254, %s270
    %p272 = scmp.eq.s32.totalorder %s20, 0
    %p273 = por %p271, %p272
    %p274 = scmp.le.s32.totalorder 1, %s14
    %p275 = scmp.lt.s32.totalorder %s14, 3
    %p276 = pnand %p274, %p275
    %p277 = pneg %p276
    // Predicated region
    $region9: #{ps_energy_model.1} parent=5 // pred_check
      _
    $region10: #{ps_energy_model.1} parent=5 // pred_check_branch
      %279 = sbr.rel (%p276) target = $region12
    $region11: #{ps_energy_model.1} parent=5 // pred_region
      %s280 = ssub.s32 %s14, 1
    $region12: #{ps_energy_model.1} parent=5 // pred_fallthru
      _
    %p281 = scmp.lt.s32.totalorder %s14, 2
    // Predicated region
    $region13: #{ps_energy_model.1} parent=5 // pred_check
      %p282 = pneg %p281
    $region14: #{ps_energy_model.1} parent=5 // pred_check_branch
      %284 = sbr.rel (%p282) target = $region16
    $region15: #{ps_energy_model.1} parent=5 // pred_region
      // Predicated region
      $region17: #{ps_energy_model.1} parent=15 // pred_check
        %p285 = pneg %p48
      $region18: #{ps_energy_model.1} parent=15 // pred_check_branch
        %287 = sbr.rel (%p285) target = $region20
      $region19: #{ps_energy_model.1} parent=15 // pred_region
        %p288 = scmp.lt.s32.totalorder %s21, 1
        %s289 = scalar_select %p288, %s21, 1
        %p290 = scmp.lt.s32.totalorder %s22, 0
        %s291 = scalar_select %p290, %s22, 0
        %s292 = sadd.s32 %s291, %s289
        %s293 = smul.addr %s292, 8
        %s294 = scalar_lea.vmem %s0, %s293
      $region20: #{ps_energy_model.1} parent=15 // pred_fallthru
        _
      // Predicated region
      $region21: #{ps_energy_model.1} parent=15 // pred_check
        %p295 = pneg %p74
      $region22: #{ps_energy_model.1} parent=15 // pred_check_branch
        %297 = sbr.rel (%p295) target = $region24
      $region23: #{ps_energy_model.1} parent=15 // pred_region
        %p298 = scmp.lt.s32.totalorder %s21, 1
        %s299 = scalar_select %p298, %s21, 1
        %s300 = smul.addr %s299, 32
        %s301 = smul.addr %s300, 4
        %s302 = scalar_lea.vmem %s1, %s301
      $region24: #{ps_energy_model.1} parent=15 // pred_fallthru
        _
      // Predicated region
      $region25: #{ps_energy_model.1} parent=15 // pred_check
        %p303 = pneg %p100
      $region26: #{ps_energy_model.1} parent=15 // pred_check_branch
        %305 = sbr.rel (%p303) target = $region28
      $region27: #{ps_energy_model.1} parent=15 // pred_region
        %p306 = scmp.lt.s32.totalorder %s21, 1
        %s307 = scalar_select %p306, %s21, 1
        %s308 = smul.addr %s307, 2
        %s309 = scalar_lea.vmem %s2, %s308
      $region28: #{ps_energy_model.1} parent=15 // pred_fallthru
        _
      // Predicated region
      $region29: #{ps_energy_model.1} parent=15 // pred_check
        %p310 = pneg %p126
      $region30: #{ps_energy_model.1} parent=15 // pred_check_branch
        %312 = sbr.rel (%p310) target = $region32
      $region31: #{ps_energy_model.1} parent=15 // pred_region
        %p313 = scmp.lt.s32.totalorder %s21, 1
        %s314 = scalar_select %p313, %s21, 1
        %s315 = smul.addr %s314, 64
        %s316 = smul.addr %s315, 4
        %s317 = scalar_lea.vmem %s3, %s316
      $region32: #{ps_energy_model.1} parent=15 // pred_fallthru
        _
      // Predicated region
      $region33: #{ps_energy_model.1} parent=15 // pred_check
        %p318 = pneg %p152
      $region34: #{ps_energy_model.1} parent=15 // pred_check_branch
        %320 = sbr.rel (%p318) target = $region36
      $region35: #{ps_energy_model.1} parent=15 // pred_region
        %p321 = scmp.lt.s32.totalorder %s21, 1
        %s322 = scalar_select %p321, %s21, 1
        %s323 = smul.addr %s322, 2
        %s324 = scalar_lea.vmem %s4, %s323
      $region36: #{ps_energy_model.1} parent=15 // pred_fallthru
        _
      // Predicated region
      $region37: #{ps_energy_model.1} parent=15 // pred_check
        %p325 = pneg %p178
      $region38: #{ps_energy_model.1} parent=15 // pred_check_branch
        %327 = sbr.rel (%p325) target = $region40
      $region39: #{ps_energy_model.1} parent=15 // pred_region
        %p328 = scmp.lt.s32.totalorder %s21, 1
        %s329 = scalar_select %p328, %s21, 1
        %s330 = smul.addr %s329, 64
        %s331 = smul.addr %s330, 4
        %s332 = scalar_lea.vmem %s5, %s331
      $region40: #{ps_energy_model.1} parent=15 // pred_fallthru
        _
      // Predicated region
      $region41: #{ps_energy_model.1} parent=15 // pred_check
        %p333 = pneg %p204
      $region42: #{ps_energy_model.1} parent=15 // pred_check_branch
        %335 = sbr.rel (%p333) target = $region44
      $region43: #{ps_energy_model.1} parent=15 // pred_region
        %p336 = scmp.lt.s32.totalorder %s21, 1
        %s337 = scalar_select %p336, %s21, 1
        %s338 = smul.addr %s337, 2
        %s339 = scalar_lea.vmem %s6, %s338
      $region44: #{ps_energy_model.1} parent=15 // pred_fallthru
        _
      // Predicated region
      $region45: #{ps_energy_model.1} parent=15 // pred_check
        %p340 = pneg %p232
      $region46: #{ps_energy_model.1} parent=15 // pred_check_branch
        %342 = sbr.rel (%p340) target = $region48
      $region47: #{ps_energy_model.1} parent=15 // pred_region
        %p343 = scmp.lt.s32.totalorder %s21, 1
        %s344 = scalar_select %p343, %s21, 1
        %p345 = scmp.lt.s32.totalorder %s22, 0
        %s346 = scalar_select %p345, %s22, 0
        %s347 = sadd.s32 %s346, %s344
        %s348 = smul.addr %s347, 4
        %s349 = scalar_lea.vmem %s7, %s348
      $region48: #{ps_energy_model.1} parent=15 // pred_fallthru
        _
    $region16: #{ps_energy_model.1} parent=5 // pred_fallthru
      _
    %p350 = scmp.le.s32.totalorder 1, %s14
    %p351 = scmp.lt.s32.totalorder %s14, 3
    %p352 = pnand %p350, %p351
    %p353 = pneg %p352
    // Predicated region
    $region49: #{ps_energy_model.1} parent=5 // pred_check
      _
    $region50: #{ps_energy_model.1} parent=5 // pred_check_branch
      %355 = sbr.rel (%p352) target = $region52
    $region51: #{ps_energy_model.1} parent=5 // pred_region
      %s356 = ssub.s32 %s14, 1
      %p357 = scmp.lt.s32.totalorder %s23, 1
      %s358 = scalar_select %p357, %s23, 1
      %p359 = scmp.lt.s32.totalorder %s24, 0
      %s360 = scalar_select %p359, %s24, 0
      %s361 = sadd.s32 %s360, %s358
      %s362 = smul.addr %s361, 8
      %s363 = scalar_lea.vmem %s0, %s362
      %p364 = pneg %p54
      %p365 = pneg %p51
      %p366 = scmp.lt.s32.totalorder %s23, 1
      %s367 = scalar_select %p366, %s23, 1
      %s368 = smul.addr %s367, 32
      %s369 = smul.addr %s368, 4
      %s370 = scalar_lea.vmem %s1, %s369
      %p371 = pneg %p80
      %p372 = pneg %p77
      %p373 = scmp.lt.s32.totalorder %s23, 1
      %s374 = scalar_select %p373, %s23, 1
      %s375 = smul.addr %s374, 2
      %s376 = scalar_lea.vmem %s2, %s375
      %p377 = pneg %p106
      %p378 = pneg %p103
      %p379 = scmp.lt.s32.totalorder %s23, 1
      %s380 = scalar_select %p379, %s23, 1
      %s381 = smul.addr %s380, 64
      %s382 = smul.addr %s381, 4
      %s383 = scalar_lea.vmem %s3, %s382
      %p384 = pneg %p132
      %p385 = pneg %p129
      %p386 = scmp.lt.s32.totalorder %s23, 1
      %s387 = scalar_select %p386, %s23, 1
      %s388 = smul.addr %s387, 2
      %s389 = scalar_lea.vmem %s4, %s388
      %p390 = pneg %p158
      %p391 = pneg %p155
      %p392 = scmp.lt.s32.totalorder %s23, 1
      %s393 = scalar_select %p392, %s23, 1
      %s394 = smul.addr %s393, 64
      %s395 = smul.addr %s394, 4
      %s396 = scalar_lea.vmem %s5, %s395
      %p397 = pneg %p184
      %p398 = pneg %p181
      %p399 = scmp.lt.s32.totalorder %s23, 1
      %s400 = scalar_select %p399, %s23, 1
      %s401 = smul.addr %s400, 2
      %s402 = scalar_lea.vmem %s6, %s401
      %p403 = pneg %p210
      %p404 = pneg %p207
      %p405 = scmp.lt.s32.totalorder %s23, 1
      %s406 = scalar_select %p405, %s23, 1
      %p407 = scmp.lt.s32.totalorder %s24, 0
      %s408 = scalar_select %p407, %s24, 0
      %s409 = sadd.s32 %s408, %s406
      %s410 = smul.addr %s409, 4
      %s411 = scalar_lea.vmem %s7, %s410
      %p412 = pneg %p238
      %p413 = pneg %p235
      %p414 = pneg %p266
      %p415 = pneg %p263
      %p416 = scmp.lt.s32.totalorder %s23, 1
      %s417 = scalar_select %p416, %s23, 1
      %p418 = scmp.lt.s32.totalorder %s24, 0
      %s419 = scalar_select %p418, %s24, 0
      %s420 = smul.addr %s419, 2
      %s421 = smul.addr %s417, 2
      %s422 = sadd.s32 %s420, %s421
      %s423 = smul.addr %s422, 8
      %s424 = scalar_lea.vmem %s8, %s423
      %p425 = scmp.lt.s32.totalorder %s23, 1
      %s426 = scalar_select %p425, %s23, 1
      %p427 = scmp.lt.s32.totalorder %s24, 0
      %s428 = scalar_select %p427, %s24, 0
      %s429 = sadd.s32 %s428, %s426
      %s430 = smul.addr %s429, 8
      %s431 = scalar_lea.vmem %s0, %s430
      %p432 = scmp.lt.s32.totalorder %s23, 1
      %s433 = scalar_select %p432, %s23, 1
      %s434 = smul.addr %s433, 32
      %s435 = smul.addr %s434, 4
      %s436 = scalar_lea.vmem %s1, %s435
      %p437 = scmp.lt.s32.totalorder %s23, 1
      %s438 = scalar_select %p437, %s23, 1
      %s439 = smul.addr %s438, 2
      %s440 = scalar_lea.vmem %s2, %s439
      %p441 = scmp.lt.s32.totalorder %s23, 1
      %s442 = scalar_select %p441, %s23, 1
      %s443 = smul.addr %s442, 64
      %s444 = smul.addr %s443, 4
      %s445 = scalar_lea.vmem %s3, %s444
      %p446 = scmp.lt.s32.totalorder %s23, 1
      %s447 = scalar_select %p446, %s23, 1
      %s448 = smul.addr %s447, 2
      %s449 = scalar_lea.vmem %s4, %s448
      %p450 = scmp.lt.s32.totalorder %s23, 1
      %s451 = scalar_select %p450, %s23, 1
      %s452 = smul.addr %s451, 64
      %s453 = smul.addr %s452, 4
      %s454 = scalar_lea.vmem %s5, %s453
      %p455 = scmp.lt.s32.totalorder %s23, 1
      %s456 = scalar_select %p455, %s23, 1
      %s457 = smul.addr %s456, 2
      %s458 = scalar_lea.vmem %s6, %s457
      %p459 = scmp.lt.s32.totalorder %s23, 1
      %s460 = scalar_select %p459, %s23, 1
      %p461 = scmp.lt.s32.totalorder %s24, 0
      %s462 = scalar_select %p461, %s24, 0
      %s463 = sadd.s32 %s462, %s460
      %s464 = smul.addr %s463, 4
      %s465 = scalar_lea.vmem %s7, %s464
      %p466 = scmp.lt.s32.totalorder %s23, 1
      %s467 = scalar_select %p466, %s23, 1
      %p468 = scmp.lt.s32.totalorder %s24, 0
      %s469 = scalar_select %p468, %s24, 0
      %s470 = smul.addr %s469, 2
      %s471 = smul.addr %s467, 2
      %s472 = sadd.s32 %s470, %s471
      %s473 = smul.addr %s472, 8
      %s474 = scalar_lea.vmem %s8, %s473
      %v476 = vld [vmem:[%s431] sm:$0xff]
      %v477 = vpack.c.bf16 %v476, %v476
      %v478 = vld [vmem:[%s436] sm:$0xff]
      %v479 = vld [vmem:[%s436 + $0x8] sm:$0xff]
      %v480 = vld [vmem:[%s436 + $0x10] sm:$0xff]
      %v481 = vld [vmem:[%s436 + $0x18] sm:$0xff]
      %v482 = vld [vmem:[%s436 + $0x20] sm:$0xff]
      %v483 = vld [vmem:[%s436 + $0x28] sm:$0xff]
      %v484 = vld [vmem:[%s436 + $0x30] sm:$0xff]
      %v485 = vld [vmem:[%s436 + $0x38] sm:$0xff]
      %v486 = vld [vmem:[%s436 + $0x40] sm:$0xff]
      %v487 = vld [vmem:[%s436 + $0x48] sm:$0xff]
      %v488 = vld [vmem:[%s436 + $0x50] sm:$0xff]
      %v489 = vld [vmem:[%s436 + $0x58] sm:$0xff]
      %v490 = vld [vmem:[%s436 + $0x60] sm:$0xff]
      %v491 = vld [vmem:[%s436 + $0x68] sm:$0xff]
      %v492 = vld [vmem:[%s436 + $0x70] sm:$0xff]
      %v493 = vld [vmem:[%s436 + $0x78] sm:$0xff]
      %v494 = vld [vmem:[%s440] sm:$0x3]
      %v496 = vlaneseq
      %v497 = vshrl.u32 %v496, 7
      %v498 = vsub.s32 0, %v497
      %v499 = vrot.slane %v494, %v498
      %v500 = vlaneseq
      %v501 = vshrl.u32 %v500, 7
      %v502 = vsub.s32 1, %v501
      %v503 = vrot.slane %v494, %v502
      %v522 = vunpack.c.l.b16 %v478
      %v523 = vunpack.c.h.b16 %v478
      %v524 = vunpack.c.l.b16 %v479
      %v525 = vunpack.c.h.b16 %v479
      %v526 = vunpack.c.l.b16 %v480
      %v527 = vunpack.c.h.b16 %v480
      %v528 = vunpack.c.l.b16 %v481
      %v529 = vunpack.c.h.b16 %v481
      %v530 = vunpack.c.l.b16 %v482
      %v531 = vunpack.c.h.b16 %v482
      %v532 = vunpack.c.l.b16 %v483
      %v533 = vunpack.c.h.b16 %v483
      %v534 = vunpack.c.l.b16 %v484
      %v535 = vunpack.c.h.b16 %v484
      %v536 = vunpack.c.l.b16 %v485
      %v537 = vunpack.c.h.b16 %v485
      %v538 = vunpack.c.l.b16 %v486
      %v539 = vunpack.c.h.b16 %v486
      %v540 = vunpack.c.l.b16 %v487
      %v541 = vunpack.c.h.b16 %v487
      %v542 = vunpack.c.l.b16 %v488
      %v543 = vunpack.c.h.b16 %v488
      %v544 = vunpack.c.l.b16 %v489
      %v545 = vunpack.c.h.b16 %v489
      %v546 = vunpack.c.l.b16 %v490
      %v547 = vunpack.c.h.b16 %v490
      %v548 = vunpack.c.l.b16 %v491
      %v549 = vunpack.c.h.b16 %v491
      %v550 = vunpack.c.l.b16 %v492
      %v551 = vunpack.c.h.b16 %v492
      %v552 = vunpack.c.l.b16 %v493
      %v553 = vunpack.c.h.b16 %v493
      %v554 = vpack.c.b16 %v524, %v522
      %v555 = vpack.c.b16 %v525, %v523
      %v556 = vpack.c.b16 %v528, %v526
      %v557 = vpack.c.b16 %v529, %v527
      %v558 = vpack.c.b16 %v532, %v530
      %v559 = vpack.c.b16 %v533, %v531
      %v560 = vpack.c.b16 %v536, %v534
      %v561 = vpack.c.b16 %v537, %v535
      %v562 = vpack.c.b16 %v540, %v538
      %v563 = vpack.c.b16 %v541, %v539
      %v564 = vpack.c.b16 %v544, %v542
      %v565 = vpack.c.b16 %v545, %v543
      %v566 = vpack.c.b16 %v548, %v546
      %v567 = vpack.c.b16 %v549, %v547
      %v568 = vpack.c.b16 %v552, %v550
      %v569 = vpack.c.b16 %v553, %v551
      %586 = vmatprep.subr.bf16.mxu0 %v569
      %587 = vmatpush1.bf16.msra.mxu0 %v568
      %588 = vmatprep.subr.bf16.mxu0 %v567
      %589 = vmatpush1.bf16.msra.mxu0 %v566
      %590 = vmatprep.subr.bf16.mxu0 %v565
      %591 = vmatpush1.bf16.msra.mxu0 %v564
      %592 = vmatprep.subr.bf16.mxu0 %v563
      %593 = vmatpush1.bf16.msra.mxu0 %v562
      %594 = vmatprep.subr.bf16.mxu0 %v561
      %595 = vmatpush1.bf16.msra.mxu0 %v560
      %596 = vmatprep.subr.bf16.mxu0 %v559
      %597 = vmatpush1.bf16.msra.mxu0 %v558
      %598 = vmatprep.subr.bf16.mxu0 %v557
      %599 = vmatpush1.bf16.msra.mxu0 %v556
      %600 = vmatprep.subr.bf16.mxu0 %v555
      %601 = vmatpush1.bf16.msra.mxu0 %v554
      %602 = vmatprep.subr.bf16.mxu0 0
      %603 = vmatpush2.bf16.msra.mxu0 0
      %604 = vmatprep.subr.bf16.mxu0 0
      %605 = vmatpush2.bf16.msra.mxu0 0
      %606 = vmatprep.subr.bf16.mxu0 0
      %607 = vmatpush2.bf16.msra.mxu0 0
      %608 = vmatprep.subr.bf16.mxu0 0
      %609 = vmatpush2.bf16.msra.mxu0 0
      %610 = vmatprep.subr.bf16.mxu0 0
      %611 = vmatpush2.bf16.msra.mxu0 0
      %612 = vmatprep.subr.bf16.mxu0 0
      %613 = vmatpush2.bf16.msra.mxu0 0
      %614 = vmatprep.subr.bf16.mxu0 0
      %615 = vmatpush2.bf16.msra.mxu0 0
      %616 = vmatprep.subr.bf16.mxu0 0
      %617 = vmatpush2.bf16.msra.mxu0 0
      %618 = vmatprep.mubr.bf16.mxu0 0
      %619 = vmatmul.mubr.bf16.gmra.mxu0 %v477
      %v620 = vpop.f32.mrf.mxu0
      %v621 = vadd.f32 %v499, %v620
      %v622 = vpop.f32.mrf.mxu0
      %v623 = vadd.f32 %v503, %v622
      %v624 = vpop.f32.mrf.mxu0
      %v625 = vpop.f32.mrf.mxu0
      %626 = vdwg.mxu0
      %v627 = vxor.u32 %v621, 2147483648
      %v628 = vxor.u32 %v623, 2147483648
      %v629 = vmul.f32 %v627, 1.442695
      %v630 = vpow.pop %v629
      %v631 = vmul.f32 %v628, 1.442695
      %v632 = vpow.pop %v631
      %v633 = vadd.f32 %v630, 1.0
      %v634 = vadd.f32 %v632, 1.0
      %v635 = vrcp.pop %v633
      %v636 = vmul.f32 1.0, %v635
      %v637 = vrcp.pop %v634
      %v638 = vmul.f32 1.0, %v637
      %v639 = vmul.f32 %v621, %v636
      %v640 = vmul.f32 %v623, %v638
      %v641 = vpack.c.bf16 %v639, %v639
      %v642 = vpack.c.bf16 %v640, %v640
      %v643 = vld [vmem:[%s445] sm:$0xff]
      %v644 = vld [vmem:[%s445 + $0x8] sm:$0xff]
      %v645 = vld [vmem:[%s445 + $0x10] sm:$0xff]
      %v646 = vld [vmem:[%s445 + $0x18] sm:$0xff]
      %v647 = vld [vmem:[%s445 + $0x20] sm:$0xff]
      %v648 = vld [vmem:[%s445 + $0x28] sm:$0xff]
      %v649 = vld [vmem:[%s445 + $0x30] sm:$0xff]
      %v650 = vld [vmem:[%s445 + $0x38] sm:$0xff]
      %v651 = vld [vmem:[%s445 + $0x40] sm:$0xff]
      %v652 = vld [vmem:[%s445 + $0x48] sm:$0xff]
      %v653 = vld [vmem:[%s445 + $0x50] sm:$0xff]
      %v654 = vld [vmem:[%s445 + $0x58] sm:$0xff]
      %v655 = vld [vmem:[%s445 + $0x60] sm:$0xff]
      %v656 = vld [vmem:[%s445 + $0x68] sm:$0xff]
      %v657 = vld [vmem:[%s445 + $0x70] sm:$0xff]
      %v658 = vld [vmem:[%s445 + $0x78] sm:$0xff]
      %v659 = vld [vmem:[%s445 + $0x80] sm:$0xff]
      %v660 = vld [vmem:[%s445 + $0x88] sm:$0xff]
      %v661 = vld [vmem:[%s445 + $0x90] sm:$0xff]
      %v662 = vld [vmem:[%s445 + $0x98] sm:$0xff]
      %v663 = vld [vmem:[%s445 + $0xa0] sm:$0xff]
      %v664 = vld [vmem:[%s445 + $0xa8] sm:$0xff]
      %v665 = vld [vmem:[%s445 + $0xb0] sm:$0xff]
      %v666 = vld [vmem:[%s445 + $0xb8] sm:$0xff]
      %v667 = vld [vmem:[%s445 + $0xc0] sm:$0xff]
      %v668 = vld [vmem:[%s445 + $0xc8] sm:$0xff]
      %v669 = vld [vmem:[%s445 + $0xd0] sm:$0xff]
      %v670 = vld [vmem:[%s445 + $0xd8] sm:$0xff]
      %v671 = vld [vmem:[%s445 + $0xe0] sm:$0xff]
      %v672 = vld [vmem:[%s445 + $0xe8] sm:$0xff]
      %v673 = vld [vmem:[%s445 + $0xf0] sm:$0xff]
      %v674 = vld [vmem:[%s445 + $0xf8] sm:$0xff]
      %v675 = vld [vmem:[%s449] sm:$0x3]
      %v677 = vlaneseq
      %v678 = vshrl.u32 %v677, 7
      %v679 = vsub.s32 0, %v678
      %v680 = vrot.slane %v675, %v679
      %v681 = vlaneseq
      %v682 = vshrl.u32 %v681, 7
      %v683 = vsub.s32 1, %v682
      %v684 = vrot.slane %v675, %v683
      %v719 = vunpack.c.l.b16 %v643
      %v720 = vunpack.c.h.b16 %v643
      %v721 = vunpack.c.l.b16 %v644
      %v722 = vunpack.c.h.b16 %v644
      %v723 = vunpack.c.l.b16 %v645
      %v724 = vunpack.c.h.b16 %v645
      %v725 = vunpack.c.l.b16 %v646
      %v726 = vunpack.c.h.b16 %v646
      %v727 = vunpack.c.l.b16 %v647
      %v728 = vunpack.c.h.b16 %v647
      %v729 = vunpack.c.l.b16 %v648
      %v730 = vunpack.c.h.b16 %v648
      %v731 = vunpack.c.l.b16 %v649
      %v732 = vunpack.c.h.b16 %v649
      %v733 = vunpack.c.l.b16 %v650
      %v734 = vunpack.c.h.b16 %v650
      %v735 = vunpack.c.l.b16 %v651
      %v736 = vunpack.c.h.b16 %v651
      %v737 = vunpack.c.l.b16 %v652
      %v738 = vunpack.c.h.b16 %v652
      %v739 = vunpack.c.l.b16 %v653
      %v740 = vunpack.c.h.b16 %v653
      %v741 = vunpack.c.l.b16 %v654
      %v742 = vunpack.c.h.b16 %v654
      %v743 = vunpack.c.l.b16 %v655
      %v744 = vunpack.c.h.b16 %v655
      %v745 = vunpack.c.l.b16 %v656
      %v746 = vunpack.c.h.b16 %v656
      %v747 = vunpack.c.l.b16 %v657
      %v748 = vunpack.c.h.b16 %v657
      %v749 = vunpack.c.l.b16 %v658
      %v750 = vunpack.c.h.b16 %v658
      %v751 = vunpack.c.l.b16 %v659
      %v752 = vunpack.c.h.b16 %v659
      %v753 = vunpack.c.l.b16 %v660
      %v754 = vunpack.c.h.b16 %v660
      %v755 = vunpack.c.l.b16 %v661
      %v756 = vunpack.c.h.b16 %v661
      %v757 = vunpack.c.l.b16 %v662
      %v758 = vunpack.c.h.b16 %v662
      %v759 = vunpack.c.l.b16 %v663
      %v760 = vunpack.c.h.b16 %v663
      %v761 = vunpack.c.l.b16 %v664
      %v762 = vunpack.c.h.b16 %v664
      %v763 = vunpack.c.l.b16 %v665
      %v764 = vunpack.c.h.b16 %v665
      %v765 = vunpack.c.l.b16 %v666
      %v766 = vunpack.c.h.b16 %v666
      %v767 = vunpack.c.l.b16 %v667
      %v768 = vunpack.c.h.b16 %v667
      %v769 = vunpack.c.l.b16 %v668
      %v770 = vunpack.c.h.b16 %v668
      %v771 = vunpack.c.l.b16 %v669
      %v772 = vunpack.c.h.b16 %v669
      %v773 = vunpack.c.l.b16 %v670
      %v774 = vunpack.c.h.b16 %v670
      %v775 = vunpack.c.l.b16 %v671
      %v776 = vunpack.c.h.b16 %v671
      %v777 = vunpack.c.l.b16 %v672
      %v778 = vunpack.c.h.b16 %v672
      %v779 = vunpack.c.l.b16 %v673
      %v780 = vunpack.c.h.b16 %v673
      %v781 = vunpack.c.l.b16 %v674
      %v782 = vunpack.c.h.b16 %v674
      %v783 = vpack.c.b16 %v721, %v719
      %v784 = vpack.c.b16 %v722, %v720
      %v785 = vpack.c.b16 %v725, %v723
      %v786 = vpack.c.b16 %v726, %v724
      %v787 = vpack.c.b16 %v729, %v727
      %v788 = vpack.c.b16 %v730, %v728
      %v789 = vpack.c.b16 %v733, %v731
      %v790 = vpack.c.b16 %v734, %v732
      %v791 = vpack.c.b16 %v737, %v735
      %v792 = vpack.c.b16 %v738, %v736
      %v793 = vpack.c.b16 %v741, %v739
      %v794 = vpack.c.b16 %v742, %v740
      %v795 = vpack.c.b16 %v745, %v743
      %v796 = vpack.c.b16 %v746, %v744
      %v797 = vpack.c.b16 %v749, %v747
      %v798 = vpack.c.b16 %v750, %v748
      %v799 = vpack.c.b16 %v753, %v751
      %v800 = vpack.c.b16 %v754, %v752
      %v801 = vpack.c.b16 %v757, %v755
      %v802 = vpack.c.b16 %v758, %v756
      %v803 = vpack.c.b16 %v761, %v759
      %v804 = vpack.c.b16 %v762, %v760
      %v805 = vpack.c.b16 %v765, %v763
      %v806 = vpack.c.b16 %v766, %v764
      %v807 = vpack.c.b16 %v769, %v767
      %v808 = vpack.c.b16 %v770, %v768
      %v809 = vpack.c.b16 %v773, %v771
      %v810 = vpack.c.b16 %v774, %v772
      %v811 = vpack.c.b16 %v777, %v775
      %v812 = vpack.c.b16 %v778, %v776
      %v813 = vpack.c.b16 %v781, %v779
      %v814 = vpack.c.b16 %v782, %v780
      %847 = vmatprep.subr.bf16.mxu0 %v798
      %848 = vmatpush1.bf16.msra.mxu0 %v797
      %849 = vmatprep.subr.bf16.mxu0 %v796
      %850 = vmatpush1.bf16.msra.mxu0 %v795
      %851 = vmatprep.subr.bf16.mxu0 %v794
      %852 = vmatpush1.bf16.msra.mxu0 %v793
      %853 = vmatprep.subr.bf16.mxu0 %v792
      %854 = vmatpush1.bf16.msra.mxu0 %v791
      %855 = vmatprep.subr.bf16.mxu0 %v790
      %856 = vmatpush1.bf16.msra.mxu0 %v789
      %857 = vmatprep.subr.bf16.mxu0 %v788
      %858 = vmatpush1.bf16.msra.mxu0 %v787
      %859 = vmatprep.subr.bf16.mxu0 %v786
      %860 = vmatpush1.bf16.msra.mxu0 %v785
      %861 = vmatprep.subr.bf16.mxu0 %v784
      %862 = vmatpush1.bf16.msra.mxu0 %v783
      %863 = vmatprep.subr.bf16.mxu0 %v814
      %864 = vmatpush2.bf16.msra.mxu0 %v813
      %865 = vmatprep.subr.bf16.mxu0 %v812
      %866 = vmatpush2.bf16.msra.mxu0 %v811
      %867 = vmatprep.subr.bf16.mxu0 %v810
      %868 = vmatpush2.bf16.msra.mxu0 %v809
      %869 = vmatprep.subr.bf16.mxu0 %v808
      %870 = vmatpush2.bf16.msra.mxu0 %v807
      %871 = vmatprep.subr.bf16.mxu0 %v806
      %872 = vmatpush2.bf16.msra.mxu0 %v805
      %873 = vmatprep.subr.bf16.mxu0 %v804
      %874 = vmatpush2.bf16.msra.mxu0 %v803
      %875 = vmatprep.subr.bf16.mxu0 %v802
      %876 = vmatpush2.bf16.msra.mxu0 %v801
      %877 = vmatprep.subr.bf16.mxu0 %v800
      %878 = vmatpush2.bf16.msra.mxu0 %v799
      %879 = vmatprep.mubr.bf16.mxu0 %v642
      %880 = vmatmul.mubr.bf16.gmra.mxu0 %v641
      %v881 = vpop.f32.mrf.mxu0
      %v882 = vadd.f32 %v680, %v881
      %v883 = vpop.f32.mrf.mxu0
      %v884 = vadd.f32 %v684, %v883
      %v885 = vpop.f32.mrf.mxu0
      %v886 = vpop.f32.mrf.mxu0
      %887 = vdwg.mxu0
      %v888 = vxor.u32 %v882, 2147483648
      %v889 = vxor.u32 %v884, 2147483648
      %v890 = vmul.f32 %v888, 1.442695
      %v891 = vpow.pop %v890
      %v892 = vmul.f32 %v889, 1.442695
      %v893 = vpow.pop %v892
      %v894 = vadd.f32 %v891, 1.0
      %v895 = vadd.f32 %v893, 1.0
      %v896 = vrcp.pop %v894
      %v897 = vmul.f32 1.0, %v896
      %v898 = vrcp.pop %v895
      %v899 = vmul.f32 1.0, %v898
      %v900 = vmul.f32 %v882, %v897
      %v901 = vmul.f32 %v884, %v899
      %v902 = vpack.c.bf16 %v900, %v900
      %v903 = vpack.c.bf16 %v901, %v901
      %v904 = vld [vmem:[%s454] sm:$0xff]
      %v905 = vld [vmem:[%s454 + $0x8] sm:$0xff]
      %v906 = vld [vmem:[%s454 + $0x10] sm:$0xff]
      %v907 = vld [vmem:[%s454 + $0x18] sm:$0xff]
      %v908 = vld [vmem:[%s454 + $0x20] sm:$0xff]
      %v909 = vld [vmem:[%s454 + $0x28] sm:$0xff]
      %v910 = vld [vmem:[%s454 + $0x30] sm:$0xff]
      %v911 = vld [vmem:[%s454 + $0x38] sm:$0xff]
      %v912 = vld [vmem:[%s454 + $0x40] sm:$0xff]
      %v913 = vld [vmem:[%s454 + $0x48] sm:$0xff]
      %v914 = vld [vmem:[%s454 + $0x50] sm:$0xff]
      %v915 = vld [vmem:[%s454 + $0x58] sm:$0xff]
      %v916 = vld [vmem:[%s454 + $0x60] sm:$0xff]
      %v917 = vld [vmem:[%s454 + $0x68] sm:$0xff]
      %v918 = vld [vmem:[%s454 + $0x70] sm:$0xff]
      %v919 = vld [vmem:[%s454 + $0x78] sm:$0xff]
      %v920 = vld [vmem:[%s454 + $0x80] sm:$0xff]
      %v921 = vld [vmem:[%s454 + $0x88] sm:$0xff]
      %v922 = vld [vmem:[%s454 + $0x90] sm:$0xff]
      %v923 = vld [vmem:[%s454 + $0x98] sm:$0xff]
      %v924 = vld [vmem:[%s454 + $0xa0] sm:$0xff]
      %v925 = vld [vmem:[%s454 + $0xa8] sm:$0xff]
      %v926 = vld [vmem:[%s454 + $0xb0] sm:$0xff]
      %v927 = vld [vmem:[%s454 + $0xb8] sm:$0xff]
      %v928 = vld [vmem:[%s454 + $0xc0] sm:$0xff]
      %v929 = vld [vmem:[%s454 + $0xc8] sm:$0xff]
      %v930 = vld [vmem:[%s454 + $0xd0] sm:$0xff]
      %v931 = vld [vmem:[%s454 + $0xd8] sm:$0xff]
      %v932 = vld [vmem:[%s454 + $0xe0] sm:$0xff]
      %v933 = vld [vmem:[%s454 + $0xe8] sm:$0xff]
      %v934 = vld [vmem:[%s454 + $0xf0] sm:$0xff]
      %v935 = vld [vmem:[%s454 + $0xf8] sm:$0xff]
      %v936 = vld [vmem:[%s458] sm:$0x3]
      %v938 = vlaneseq
      %v939 = vshrl.u32 %v938, 7
      %v940 = vsub.s32 0, %v939
      %v941 = vrot.slane %v936, %v940
      %v942 = vlaneseq
      %v943 = vshrl.u32 %v942, 7
      %v944 = vsub.s32 1, %v943
      %v945 = vrot.slane %v936, %v944
      %v980 = vunpack.c.l.b16 %v904
      %v981 = vunpack.c.h.b16 %v904
      %v982 = vunpack.c.l.b16 %v905
      %v983 = vunpack.c.h.b16 %v905
      %v984 = vunpack.c.l.b16 %v906
      %v985 = vunpack.c.h.b16 %v906
      %v986 = vunpack.c.l.b16 %v907
      %v987 = vunpack.c.h.b16 %v907
      %v988 = vunpack.c.l.b16 %v908
      %v989 = vunpack.c.h.b16 %v908
      %v990 = vunpack.c.l.b16 %v909
      %v991 = vunpack.c.h.b16 %v909
      %v992 = vunpack.c.l.b16 %v910
      %v993 = vunpack.c.h.b16 %v910
      %v994 = vunpack.c.l.b16 %v911
      %v995 = vunpack.c.h.b16 %v911
      %v996 = vunpack.c.l.b16 %v912
      %v997 = vunpack.c.h.b16 %v912
      %v998 = vunpack.c.l.b16 %v913
      %v999 = vunpack.c.h.b16 %v913
      %v1000 = vunpack.c.l.b16 %v914
      %v1001 = vunpack.c.h.b16 %v914
      %v1002 = vunpack.c.l.b16 %v915
      %v1003 = vunpack.c.h.b16 %v915
      %v1004 = vunpack.c.l.b16 %v916
      %v1005 = vunpack.c.h.b16 %v916
      %v1006 = vunpack.c.l.b16 %v917
      %v1007 = vunpack.c.h.b16 %v917
      %v1008 = vunpack.c.l.b16 %v918
      %v1009 = vunpack.c.h.b16 %v918
      %v1010 = vunpack.c.l.b16 %v919
      %v1011 = vunpack.c.h.b16 %v919
      %v1012 = vunpack.c.l.b16 %v920
      %v1013 = vunpack.c.h.b16 %v920
      %v1014 = vunpack.c.l.b16 %v921
      %v1015 = vunpack.c.h.b16 %v921
      %v1016 = vunpack.c.l.b16 %v922
      %v1017 = vunpack.c.h.b16 %v922
      %v1018 = vunpack.c.l.b16 %v923
      %v1019 = vunpack.c.h.b16 %v923
      %v1020 = vunpack.c.l.b16 %v924
      %v1021 = vunpack.c.h.b16 %v924
      %v1022 = vunpack.c.l.b16 %v925
      %v1023 = vunpack.c.h.b16 %v925
      %v1024 = vunpack.c.l.b16 %v926
      %v1025 = vunpack.c.h.b16 %v926
      %v1026 = vunpack.c.l.b16 %v927
      %v1027 = vunpack.c.h.b16 %v927
      %v1028 = vunpack.c.l.b16 %v928
      %v1029 = vunpack.c.h.b16 %v928
      %v1030 = vunpack.c.l.b16 %v929
      %v1031 = vunpack.c.h.b16 %v929
      %v1032 = vunpack.c.l.b16 %v930
      %v1033 = vunpack.c.h.b16 %v930
      %v1034 = vunpack.c.l.b16 %v931
      %v1035 = vunpack.c.h.b16 %v931
      %v1036 = vunpack.c.l.b16 %v932
      %v1037 = vunpack.c.h.b16 %v932
      %v1038 = vunpack.c.l.b16 %v933
      %v1039 = vunpack.c.h.b16 %v933
      %v1040 = vunpack.c.l.b16 %v934
      %v1041 = vunpack.c.h.b16 %v934
      %v1042 = vunpack.c.l.b16 %v935
      %v1043 = vunpack.c.h.b16 %v935
      %v1044 = vpack.c.b16 %v982, %v980
      %v1045 = vpack.c.b16 %v983, %v981
      %v1046 = vpack.c.b16 %v986, %v984
      %v1047 = vpack.c.b16 %v987, %v985
      %v1048 = vpack.c.b16 %v990, %v988
      %v1049 = vpack.c.b16 %v991, %v989
      %v1050 = vpack.c.b16 %v994, %v992
      %v1051 = vpack.c.b16 %v995, %v993
      %v1052 = vpack.c.b16 %v998, %v996
      %v1053 = vpack.c.b16 %v999, %v997
      %v1054 = vpack.c.b16 %v1002, %v1000
      %v1055 = vpack.c.b16 %v1003, %v1001
      %v1056 = vpack.c.b16 %v1006, %v1004
      %v1057 = vpack.c.b16 %v1007, %v1005
      %v1058 = vpack.c.b16 %v1010, %v1008
      %v1059 = vpack.c.b16 %v1011, %v1009
      %v1060 = vpack.c.b16 %v1014, %v1012
      %v1061 = vpack.c.b16 %v1015, %v1013
      %v1062 = vpack.c.b16 %v1018, %v1016
      %v1063 = vpack.c.b16 %v1019, %v1017
      %v1064 = vpack.c.b16 %v1022, %v1020
      %v1065 = vpack.c.b16 %v1023, %v1021
      %v1066 = vpack.c.b16 %v1026, %v1024
      %v1067 = vpack.c.b16 %v1027, %v1025
      %v1068 = vpack.c.b16 %v1030, %v1028
      %v1069 = vpack.c.b16 %v1031, %v1029
      %v1070 = vpack.c.b16 %v1034, %v1032
      %v1071 = vpack.c.b16 %v1035, %v1033
      %v1072 = vpack.c.b16 %v1038, %v1036
      %v1073 = vpack.c.b16 %v1039, %v1037
      %v1074 = vpack.c.b16 %v1042, %v1040
      %v1075 = vpack.c.b16 %v1043, %v1041
      %1108 = vmatprep.subr.bf16.mxu0 %v1059
      %1109 = vmatpush1.bf16.msra.mxu0 %v1058
      %1110 = vmatprep.subr.bf16.mxu0 %v1057
      %1111 = vmatpush1.bf16.msra.mxu0 %v1056
      %1112 = vmatprep.subr.bf16.mxu0 %v1055
      %1113 = vmatpush1.bf16.msra.mxu0 %v1054
      %1114 = vmatprep.subr.bf16.mxu0 %v1053
      %1115 = vmatpush1.bf16.msra.mxu0 %v1052
      %1116 = vmatprep.subr.bf16.mxu0 %v1051
      %1117 = vmatpush1.bf16.msra.mxu0 %v1050
      %1118 = vmatprep.subr.bf16.mxu0 %v1049
      %1119 = vmatpush1.bf16.msra.mxu0 %v1048
      %1120 = vmatprep.subr.bf16.mxu0 %v1047
      %1121 = vmatpush1.bf16.msra.mxu0 %v1046
      %1122 = vmatprep.subr.bf16.mxu0 %v1045
      %1123 = vmatpush1.bf16.msra.mxu0 %v1044
      %1124 = vmatprep.subr.bf16.mxu0 %v1075
      %1125 = vmatpush2.bf16.msra.mxu0 %v1074
      %1126 = vmatprep.subr.bf16.mxu0 %v1073
      %1127 = vmatpush2.bf16.msra.mxu0 %v1072
      %1128 = vmatprep.subr.bf16.mxu0 %v1071
      %1129 = vmatpush2.bf16.msra.mxu0 %v1070
      %1130 = vmatprep.subr.bf16.mxu0 %v1069
      %1131 = vmatpush2.bf16.msra.mxu0 %v1068
      %1132 = vmatprep.subr.bf16.mxu0 %v1067
      %1133 = vmatpush2.bf16.msra.mxu0 %v1066
      %1134 = vmatprep.subr.bf16.mxu0 %v1065
      %1135 = vmatpush2.bf16.msra.mxu0 %v1064
      %1136 = vmatprep.subr.bf16.mxu0 %v1063
      %1137 = vmatpush2.bf16.msra.mxu0 %v1062
      %1138 = vmatprep.subr.bf16.mxu0 %v1061
      %1139 = vmatpush2.bf16.msra.mxu0 %v1060
      %1140 = vmatprep.mubr.bf16.mxu0 %v903
      %1141 = vmatmul.mubr.bf16.gmra.mxu0 %v902
      %v1142 = vpop.f32.mrf.mxu0
      %v1143 = vadd.f32 %v941, %v1142
      %v1144 = vpop.f32.mrf.mxu0
      %v1145 = vadd.f32 %v945, %v1144
      %v1146 = vpop.f32.mrf.mxu0
      %v1147 = vpop.f32.mrf.mxu0
      %1148 = vdwg.mxu0
      %v1149 = vxor.u32 %v1143, 2147483648
      %v1150 = vxor.u32 %v1145, 2147483648
      %v1151 = vmul.f32 %v1149, 1.442695
      %v1152 = vpow.pop %v1151
      %v1153 = vmul.f32 %v1150, 1.442695
      %v1154 = vpow.pop %v1153
      %v1155 = vadd.f32 %v1152, 1.0
      %v1156 = vadd.f32 %v1154, 1.0
      %v1157 = vrcp.pop %v1155
      %v1158 = vmul.f32 1.0, %v1157
      %v1159 = vrcp.pop %v1156
      %v1160 = vmul.f32 1.0, %v1159
      %v1161 = vmul.f32 %v1143, %v1158
      %v1162 = vmul.f32 %v1145, %v1160
      %v1163 = vld [vmem:[%s465] sm:$0xf]
      %v1164 = vpack.c.bf16 %v1161, %v1161
      %v1165 = vpack.c.bf16 %v1162, %v1162
      %vm1166 = vcmask 64512
      %v1168 = vsel %vm1166, %v1163, 0
      %vm1170 = vcmask 1043456
      %v1172 = vsel %vm1170, %v1164, 0
      %v1175 = vsel %vm1170, %v1165, 0
      %1177 = vmatprep.subr.bf16.mxu0 0
      %1178 = vmatpush1.bf16.msra.mxu0 0
      %1179 = vmatprep.subr.bf16.mxu0 0
      %1180 = vmatpush1.bf16.msra.mxu0 0
      %1181 = vmatprep.subr.bf16.mxu0 0
      %1182 = vmatpush1.bf16.msra.mxu0 0
      %1183 = vmatprep.subr.bf16.mxu0 0
      %1184 = vmatpush1.bf16.msra.mxu0 0
      %1185 = vmatprep.subr.bf16.mxu0 0
      %1186 = vmatpush1.bf16.msra.mxu0 0
      %1187 = vmatprep.subr.bf16.mxu0 0
      %1188 = vmatpush1.bf16.msra.mxu0 0
      %1189 = vmatprep.subr.bf16.mxu0 0
      %1190 = vmatpush1.bf16.msra.mxu0 0
      %1191 = vmatprep.subr.bf16.mxu0 %v1175
      %1192 = vmatpush1.bf16.msra.mxu0 %v1172
      %1193 = vmatprep.subr.bf16.mxu0 0
      %1194 = vmatpush2.bf16.msra.mxu0 0
      %1195 = vmatprep.subr.bf16.mxu0 0
      %1196 = vmatpush2.bf16.msra.mxu0 0
      %1197 = vmatprep.subr.bf16.mxu0 0
      %1198 = vmatpush2.bf16.msra.mxu0 0
      %1199 = vmatprep.subr.bf16.mxu0 0
      %1200 = vmatpush2.bf16.msra.mxu0 0
      %1201 = vmatprep.subr.bf16.mxu0 0
      %1202 = vmatpush2.bf16.msra.mxu0 0
      %1203 = vmatprep.subr.bf16.mxu0 0
      %1204 = vmatpush2.bf16.msra.mxu0 0
      %1205 = vmatprep.subr.bf16.mxu0 0
      %1206 = vmatpush2.bf16.msra.mxu0 0
      %1207 = vmatprep.subr.bf16.mxu0 0
      %1208 = vmatpush2.bf16.msra.mxu0 0
      %1209 = vmatprep.mubr.bf16.mxu0 0
      %1210 = vmatmul.mubr.bf16.gmra.mxu0 %v1168
      %v1211 = vpop.f32.mrf.mxu0
      %v1212 = vadd.f32 0.0, %v1211
      %v1213 = vpop.f32.mrf.mxu0
      %v1214 = vadd.f32 0.0, %v1213
      %v1215 = vpop.f32.mrf.mxu0
      %v1216 = vpop.f32.mrf.mxu0
      %1217 = vdwg.mxu0
      %1218 = vst [vmem:[%s474] sm:$0xff] %v1212
      %1219 = vst [vmem:[%s474 + $0x8] sm:$0xff] %v1214
      %p1220 = scmp.lt.s32.totalorder %s23, 1
      %s1221 = scalar_select %p1220, %s23, 1
      %p1222 = scmp.lt.s32.totalorder %s24, 0
      %s1223 = scalar_select %p1222, %s24, 0
      %s1224 = smul.addr %s1223, 2
      %s1225 = smul.addr %s1221, 2
      %s1226 = sadd.s32 %s1224, %s1225
      %s1227 = smul.addr %s1226, 8
      %s1228 = scalar_lea.vmem %s8, %s1227
      // Predicated region
      $region53: #{ps_energy_model.1} parent=51 // pred_check
        %p1229 = pneg %p263
      $region54: #{ps_energy_model.1} parent=51 // pred_check_branch
        %1231 = sbr.rel (%p1229) target = $region56
      $region55: #{ps_energy_model.1} parent=51 // pred_region
        _
      $region56: #{ps_energy_model.1} parent=51 // pred_fallthru
        _
    $region52: #{ps_energy_model.1} parent=5 // pred_fallthru
      _
    %p1232 = scmp.le.s32.totalorder 2, %s14
    // Predicated region
    $region57: #{ps_energy_model.1} parent=5 // pred_check
      %p1233 = pneg %p1232
    $region58: #{ps_energy_model.1} parent=5 // pred_check_branch
      %1235 = sbr.rel (%p1233) target = $region60
    $region59: #{ps_energy_model.1} parent=5 // pred_region
      %s1236 = ssub.s32 %s14, 2
      // Predicated region
      $region61: #{ps_energy_model.1} parent=59 // pred_check
        %p1237 = pneg %p269
      $region62: #{ps_energy_model.1} parent=59 // pred_check_branch
        %1239 = sbr.rel (%p1237) target = $region64
      $region63: #{ps_energy_model.1} parent=59 // pred_region
        %p1240 = scmp.lt.s32.totalorder %s25, 1
        %s1241 = scalar_select %p1240, %s25, 1
        %p1242 = scmp.lt.s32.totalorder %s26, 0
        %s1243 = scalar_select %p1242, %s26, 0
        %s1244 = smul.addr %s1243, 2
        %s1245 = smul.addr %s1241, 2
        %s1246 = sadd.s32 %s1244, %s1245
        %s1247 = smul.addr %s1246, 8
        %s1248 = scalar_lea.vmem %s8, %s1247
      $region64: #{ps_energy_model.1} parent=59 // pred_fallthru
        _
    $region60: #{ps_energy_model.1} parent=5 // pred_fallthru
      _
  $region6: #{ps_energy_model.1} parent=0 // loop_footer
    %s18 = sadd.s32 1, %s14
  $region7: #{ps_energy_model.1} parent=0 // loop_footer_branch
    %13 = sbr.rel target = $region3
  $region8: #{ps_energy_model.1} parent=0 // loop_exit
    _

</llo_original>
